<compile_context>
chip_gen: v5e
topology: v5e:2x2
jax: 0.10.0
libtpu: 0.0.40
codegen_flags: <defaults>
</compile_context>

<pallas_src>
import functools

import jax
import jax.numpy as jnp
from jax.experimental import pallas as pl
from jax.experimental.pallas import tpu as pltpu


_NEG_BIG = -1e30  # finite "-inf" used for class padding (avoids NaN from inf - inf)


def _round_up(x, m):
    return (x + m - 1) // m * m


def _ce_kernel(logits_ref, targets_ref, loss_ref, m_ref, l_ref, t_ref, *, tile_c):
    """Processes one (TILE_N, TILE_C) logits tile with an online LSE reduction over C."""
    k = pl.program_id(1)

    @pl.when(k == 0)
    def _init():
        m_ref[...] = jnp.full(m_ref.shape, -jnp.inf, dtype=jnp.float32)
        l_ref[...] = jnp.zeros(l_ref.shape, dtype=jnp.float32)
        t_ref[...] = jnp.zeros(t_ref.shape, dtype=jnp.float32)

    logits = logits_ref[...].astype(jnp.float32)            # (TILE_N, TILE_C)
    tgt = targets_ref[...]                                   # (TILE_N, 1) int32

    # Global class index of every lane in this C tile.
    cls = jax.lax.broadcasted_iota(jnp.int32, logits.shape, 1) + k * tile_c
    hit = cls == tgt                                         # (TILE_N, TILE_C)

    # Single sweep over the tile: block max, rescaled exp-sum, and the masked
    # target-logit sum fused into the same pass (no second traversal).
    blk_max = jnp.max(logits, axis=-1, keepdims=True)        # (TILE_N, 1)
    m_new = jnp.maximum(m_ref[...], blk_max)
    scale = jnp.exp(m_ref[...] - m_new)
    p = jnp.exp(logits - m_new)
    l_ref[...] = scale * l_ref[...] + jnp.sum(p, axis=-1, keepdims=True)
    t_ref[...] = t_ref[...] + jnp.sum(
        jnp.where(hit, logits, 0.0), axis=-1, keepdims=True)
    m_ref[...] = m_new

    @pl.when(k == pl.num_programs(1) - 1)
    def _finalize():
        lse = m_ref[...] + jnp.log(l_ref[...])
        per_sample = lse - t_ref[...]                        # -log_softmax[target]
        # Rows with negative targets (batch padding / ignore_index) contribute 0.
        loss_ref[...] = jnp.where(tgt >= 0, per_sample, 0.0)


def cross_entropy_pallas(logits, targets, reduction="mean", *,
                         block_n=128, block_c=8192):
    """F.cross_entropy(logits, targets, weight=None): logits (N, C), targets (N,)."""
    n, c = logits.shape

    tile_n = min(block_n, _round_up(n, 8))
    n_pad = _round_up(n, tile_n)

    c128 = _round_up(c, 128)                   # lane-dense class axis
    tile_c = _round_up(min(block_c, c128), 128)
    c_pad = _round_up(c128, tile_c)

    logits_p = jnp.pad(logits, ((0, n_pad - n), (0, c_pad - c)),
                       constant_values=_NEG_BIG)
    targets_p = jnp.pad(targets.astype(jnp.int32), (0, n_pad - n),
                        constant_values=-1).reshape(n_pad, 1)

    grid = (n_pad // tile_n, c_pad // tile_c)

    per_sample = pl.pallas_call(
        functools.partial(_ce_kernel, tile_c=tile_c),
        out_shape=jax.ShapeDtypeStruct((n_pad, 1), jnp.float32),
        grid_spec=pltpu.PrefetchScalarGridSpec(
            num_scalar_prefetch=0,
            grid=grid,
            in_specs=[
                pl.BlockSpec((tile_n, tile_c), lambda i, k: (i, k)),  # logits tile
                pl.BlockSpec((tile_n, 1), lambda i, k: (i, 0)),       # targets (tiny)
            ],
            out_specs=pl.BlockSpec((tile_n, 1), lambda i, k: (i, 0)),
            scratch_shapes=[
                pltpu.VMEM((tile_n, 1), jnp.float32),  # running max
                pltpu.VMEM((tile_n, 1), jnp.float32),  # running sum-exp
                pltpu.VMEM((tile_n, 1), jnp.float32),  # running target logit
            ],
        ),
        compiler_params=pltpu.CompilerParams(
            dimension_semantics=("parallel", "arbitrary"),
        ),
    )(logits_p, targets_p)

    per_sample = per_sample[:n, 0]
    if reduction == "none":
        return per_sample
    total = jnp.sum(per_sample)
    if reduction == "sum":
        return total
    # 'mean': divide by number of non-ignored targets (== N in the default case).
    denom = jnp.maximum(jnp.sum((targets >= 0).astype(jnp.float32)), 1.0)
    return total / denom


if __name__ == "__main__":
    key = jax.random.PRNGKey(0)
    k1, k2, k3, k4 = jax.random.split(key, 4)

    # Toy CIFAR-style shapes: batch=8 logits over 32 classes (single tile, padded to 128 lanes).
    N, C = 8, 32
    logits = jax.random.normal(k1, (N, C), dtype=jnp.float32)
    targets = jax.random.randint(k2, (N,), 0, C, dtype=jnp.int32)

    loss = jax.block_until_ready(cross_entropy_pallas(logits, targets))
    ref = jnp.mean(jax.nn.logsumexp(logits, axis=-1) - logits[jnp.arange(N), targets])
    assert jnp.allclose(loss, ref, rtol=1e-5, atol=1e-5), (loss, ref)

    # Second case exercises N tiling, batch-row padding and multi-step online LSE over C.
    N2, C2 = 200, 384
    logits2 = jax.random.normal(k3, (N2, C2), dtype=jnp.float32)
    targets2 = jax.random.randint(k4, (N2,), 0, C2, dtype=jnp.int32)
    loss2 = jax.block_until_ready(cross_entropy_pallas(logits2, targets2, block_c=128))
    ref2 = jnp.mean(
        jax.nn.logsumexp(logits2, axis=-1) - logits2[jnp.arange(N2), targets2])
    assert jnp.allclose(loss2, ref2, rtol=1e-5, atol=1e-5), (loss2, ref2)

    print("KERNEL_OK")
</pallas_src>

<mosaic_0001>
module attributes {stable_mosaic.version = 11 : i64} {
  func.func @_ce_kernel(%arg0: i32, %arg1: i32, %arg2: memref<8x128xf32, #tpu.memory_space<vmem>>, %arg3: memref<8x1xi32, #tpu.memory_space<vmem>>, %arg4: memref<8x1xf32, #tpu.memory_space<vmem>>, %arg5: memref<8x1xf32, #tpu.memory_space<vmem>>, %arg6: memref<8x1xf32, #tpu.memory_space<vmem>>, %arg7: memref<8x1xf32, #tpu.memory_space<vmem>>) attributes {dimension_semantics = [#tpu.dimension_semantics<parallel>, #tpu.dimension_semantics<arbitrary>], iteration_bounds = array<i64: 1, 1>, scalar_prefetch = 0 : i64, scratch_operands = 3 : i64, tpu.core_type = #tpu.core_type<tc>, window_params = [{transform_indices = @transform_0, window_bounds = array<i64: 8, 128>}, {transform_indices = @transform_1, window_bounds = array<i64: 8, 1>}, {transform_indices = @transform_2, window_bounds = array<i64: 8, 1>}]} {
    %c0_i32 = arith.constant 0 : i32
    %0 = arith.cmpi eq, %arg1, %c0_i32 : i32
    %1 = arith.extui %0 : i1 to i32
    %c0_i32_0 = arith.constant 0 : i32
    %2 = arith.cmpi ne, %1, %c0_i32_0 : i32
    scf.if %2 {
      %cst_23 = arith.constant 0xFF800000 : f32
      %38 = vector.broadcast %cst_23 : f32 to vector<8x1xf32>
      %c0_24 = arith.constant 0 : index
      %c0_25 = arith.constant 0 : index
      %39 = vector.load %arg5[%c0_24, %c0_25] : memref<8x1xf32, #tpu.memory_space<vmem>>, vector<8x1xf32>
      tpu.vector_store %arg5[%c0_24, %c0_25], %38 {strides = array<i32>} : memref<8x1xf32, #tpu.memory_space<vmem>>, vector<8x1xf32>,
      %cst_26 = arith.constant 0.000000e+00 : f32
      %40 = vector.broadcast %cst_26 : f32 to vector<8x1xf32>
      %c0_27 = arith.constant 0 : index
      %c0_28 = arith.constant 0 : index
      %41 = vector.load %arg6[%c0_27, %c0_28] : memref<8x1xf32, #tpu.memory_space<vmem>>, vector<8x1xf32>
      tpu.vector_store %arg6[%c0_27, %c0_28], %40 {strides = array<i32>} : memref<8x1xf32, #tpu.memory_space<vmem>>, vector<8x1xf32>,
      %cst_29 = arith.constant 0.000000e+00 : f32
      %42 = vector.broadcast %cst_29 : f32 to vector<8x1xf32>
      %c0_30 = arith.constant 0 : index
      %c0_31 = arith.constant 0 : index
      %43 = vector.load %arg7[%c0_30, %c0_31] : memref<8x1xf32, #tpu.memory_space<vmem>>, vector<8x1xf32>
      tpu.vector_store %arg7[%c0_30, %c0_31], %42 {strides = array<i32>} : memref<8x1xf32, #tpu.memory_space<vmem>>, vector<8x1xf32>,
    } else {
    }
    %c0 = arith.constant 0 : index
    %c0_1 = arith.constant 0 : index
    %3 = vector.load %arg2[%c0, %c0_1] : memref<8x128xf32, #tpu.memory_space<vmem>>, vector<8x128xf32>
    %c0_2 = arith.constant 0 : index
    %c0_3 = arith.constant 0 : index
    %4 = vector.load %arg3[%c0_2, %c0_3] : memref<8x1xi32, #tpu.memory_space<vmem>>, vector<8x1xi32>
    %5 = tpu.iota {dimensions = array<i32: 1>} : vector<8x128xi32>
    %c128_i32 = arith.constant 128 : i32
    %6 = arith.muli %arg1, %c128_i32 : i32
    %7 = vector.broadcast %6 : i32 to vector<8x128xi32>
    %8 = arith.addi %5, %7 : vector<8x128xi32>
    %9 = vector.broadcast %4 : vector<8x1xi32> to vector<8x128xi32>
    %10 = arith.cmpi eq, %8, %9 : vector<8x128xi32>
    %cst = arith.constant dense<0xFF800000> : vector<8xf32>
    %11 = vector.multi_reduction <maximumf>, %3, %cst [1] : vector<8x128xf32> to vector<8xf32>
    %12 = vector.shape_cast %11 : vector<8xf32> to vector<8x1xf32>
    %c0_4 = arith.constant 0 : index
    %c0_5 = arith.constant 0 : index
    %13 = vector.load %arg5[%c0_4, %c0_5] : memref<8x1xf32, #tpu.memory_space<vmem>>, vector<8x1xf32>
    %14 = arith.maximumf %13, %12 : vector<8x1xf32>
    %c0_6 = arith.constant 0 : index
    %c0_7 = arith.constant 0 : index
    %15 = vector.load %arg5[%c0_6, %c0_7] : memref<8x1xf32, #tpu.memory_space<vmem>>, vector<8x1xf32>
    %16 = arith.subf %15, %14 : vector<8x1xf32>
    %17 = math.exp %16 : vector<8x1xf32>
    %18 = vector.broadcast %14 : vector<8x1xf32> to vector<8x128xf32>
    %19 = arith.subf %3, %18 : vector<8x128xf32>
    %20 = math.exp %19 : vector<8x128xf32>
    %c0_8 = arith.constant 0 : index
    %c0_9 = arith.constant 0 : index
    %21 = vector.load %arg6[%c0_8, %c0_9] : memref<8x1xf32, #tpu.memory_space<vmem>>, vector<8x1xf32>
    %22 = arith.mulf %17, %21 : vector<8x1xf32>
    %cst_10 = arith.constant dense<0.000000e+00> : vector<8xf32>
    %23 = vector.multi_reduction <add>, %20, %cst_10 [1] : vector<8x128xf32> to vector<8xf32>
    %24 = vector.shape_cast %23 : vector<8xf32> to vector<8x1xf32>
    %25 = arith.addf %22, %24 : vector<8x1xf32>
    %c0_11 = arith.constant 0 : index
    %c0_12 = arith.constant 0 : index
    %26 = vector.load %arg6[%c0_11, %c0_12] : memref<8x1xf32, #tpu.memory_space<vmem>>, vector<8x1xf32>
    tpu.vector_store %arg6[%c0_11, %c0_12], %25 {strides = array<i32>} : memref<8x1xf32, #tpu.memory_space<vmem>>, vector<8x1xf32>,
    %c0_13 = arith.constant 0 : index
    %c0_14 = arith.constant 0 : index
    %27 = vector.load %arg7[%c0_13, %c0_14] : memref<8x1xf32, #tpu.memory_space<vmem>>, vector<8x1xf32>
    %cst_15 = arith.constant 0.000000e+00 : f32
    %28 = vector.broadcast %cst_15 : f32 to vector<8x128xf32>
    %29 = arith.select %10, %3, %28 : vector<8x128xi1>, vector<8x128xf32>
    %cst_16 = arith.constant dense<0.000000e+00> : vector<8xf32>
    %30 = vector.multi_reduction <add>, %29, %cst_16 [1] : vector<8x128xf32> to vector<8xf32>
    %31 = vector.shape_cast %30 : vector<8xf32> to vector<8x1xf32>
    %32 = arith.addf %27, %31 : vector<8x1xf32>
    %c0_17 = arith.constant 0 : index
    %c0_18 = arith.constant 0 : index
    %33 = vector.load %arg7[%c0_17, %c0_18] : memref<8x1xf32, #tpu.memory_space<vmem>>, vector<8x1xf32>
    tpu.vector_store %arg7[%c0_17, %c0_18], %32 {strides = array<i32>} : memref<8x1xf32, #tpu.memory_space<vmem>>, vector<8x1xf32>,
    %c0_19 = arith.constant 0 : index
    %c0_20 = arith.constant 0 : index
    %34 = vector.load %arg5[%c0_19, %c0_20] : memref<8x1xf32, #tpu.memory_space<vmem>>, vector<8x1xf32>
    tpu.vector_store %arg5[%c0_19, %c0_20], %14 {strides = array<i32>} : memref<8x1xf32, #tpu.memory_space<vmem>>, vector<8x1xf32>,
    %c0_i32_21 = arith.constant 0 : i32
    %35 = arith.cmpi eq, %arg1, %c0_i32_21 : i32
    %36 = arith.extui %35 : i1 to i32
    %c0_i32_22 = arith.constant 0 : i32
    %37 = arith.cmpi ne, %36, %c0_i32_22 : i32
    scf.if %37 {
      %c0_23 = arith.constant 0 : index
      %c0_24 = arith.constant 0 : index
      %38 = vector.load %arg5[%c0_23, %c0_24] : memref<8x1xf32, #tpu.memory_space<vmem>>, vector<8x1xf32>
      %c0_25 = arith.constant 0 : index
      %c0_26 = arith.constant 0 : index
      %39 = vector.load %arg6[%c0_25, %c0_26] : memref<8x1xf32, #tpu.memory_space<vmem>>, vector<8x1xf32>
      %40 = math.log %39 : vector<8x1xf32>
      %41 = arith.addf %38, %40 : vector<8x1xf32>
      %c0_27 = arith.constant 0 : index
      %c0_28 = arith.constant 0 : index
      %42 = vector.load %arg7[%c0_27, %c0_28] : memref<8x1xf32, #tpu.memory_space<vmem>>, vector<8x1xf32>
      %43 = arith.subf %41, %42 : vector<8x1xf32>
      %c0_i32_29 = arith.constant 0 : i32
      %44 = vector.broadcast %c0_i32_29 : i32 to vector<8x1xi32>
      %45 = arith.cmpi sge, %4, %44 : vector<8x1xi32>
      %cst_30 = arith.constant 0.000000e+00 : f32
      %46 = vector.broadcast %cst_30 : f32 to vector<8x1xf32>
      %47 = arith.select %45, %43, %46 : vector<8x1xi1>, vector<8x1xf32>
      %c0_31 = arith.constant 0 : index
      %c0_32 = arith.constant 0 : index
      %48 = vector.load %arg4[%c0_31, %c0_32] : memref<8x1xf32, #tpu.memory_space<vmem>>, vector<8x1xf32>
      tpu.vector_store %arg4[%c0_31, %c0_32], %47 {strides = array<i32>} : memref<8x1xf32, #tpu.memory_space<vmem>>, vector<8x1xf32>,
    } else {
    }
    return
  }
  func.func @transform_0(%arg0: i32, %arg1: i32) -> (i32, i32) {
    %c0_i32 = arith.constant 0 : i32
    return %arg0, %arg1 : i32, i32
  }
  func.func @transform_1(%arg0: i32, %arg1: i32) -> (i32, i32) {
    %c0_i32 = arith.constant 0 : i32
    %c0_i32_0 = arith.constant 0 : i32
    return %arg0, %c0_i32 : i32, i32
  }
  func.func @transform_2(%arg0: i32, %arg1: i32) -> (i32, i32) {
    %c0_i32 = arith.constant 0 : i32
    %c0_i32_0 = arith.constant 0 : i32
    return %arg0, %c0_i32 : i32, i32
  }
}

</mosaic_0001>

<llo_original>
// kernel: tpu_custom_call.1
$region0: #{tpu_custom_call.1}
  #allocation0 [shape = 'u32[]', space=smem, size = 0x4, offset = 0x4, fixed_abs, tag = 'smem constant byte address 0x4 - core index']
  #allocation1 [shape = 'u32[72,128]{1,0:T(1,128)}', space=vmem, size = 0x9000, scoped, tag = 'internal scratch']
  #allocation2 [shape = 'f32[8,1]{1,0:T(8,128)}', space=vmem, size = 0x1000, scoped, tag = 'scratch operand']
  #allocation3 [shape = 'f32[8,1]{1,0:T(8,128)}', space=vmem, size = 0x1000, scoped, tag = 'scratch operand']
  #allocation4 [shape = 'f32[8,1]{1,0:T(8,128)}', space=vmem, size = 0x1000, scoped, tag = 'scratch operand']
  %s0 = inlined_call_operand.vmem [shape: f32[8,128], index: 0, kind: input, shape index: {}]
  %s1 = inlined_call_operand.vmem [shape: s32[8,1], index: 1, kind: input, shape index: {}]
  %s2 = inlined_call_operand.vmem [shape: f32[8,1], index: 2, kind: output, shape index: {}]
  %s3 = sld [smem:[#allocation0]]
  $region26: #{tpu_custom_call.1} parent=0
    _
  %s5 = ssub.s32 1, %s3
  %s6 = scalar_select 0, %s5, %s3
  // Predicated region
  $region2: #{tpu_custom_call.1} parent=0 // pred_check
    _
  $region3: #{tpu_custom_call.1} parent=0 // pred_check_branch
    %8 = sbr.rel (0) target = $region5
  $region4: #{tpu_custom_call.1} parent=0 // pred_region
    _
  $region5: #{tpu_custom_call.1} parent=0 // pred_fallthru
    _
  // Predicated region
  $region6: #{tpu_custom_call.1} parent=0 // pred_check
    _
  $region7: #{tpu_custom_call.1} parent=0 // pred_check_branch
    %10 = sbr.rel (0) target = $region9
  $region8: #{tpu_custom_call.1} parent=0 // pred_region
    _
  $region9: #{tpu_custom_call.1} parent=0 // pred_fallthru
    _
  %p11 = scmp.eq.s32.totalorder 0, 0
  // Predicated region
  $region10: #{tpu_custom_call.1} parent=0 // pred_check
    %p12 = pneg %p11
  $region11: #{tpu_custom_call.1} parent=0 // pred_check_branch
    %14 = sbr.rel (%p12) target = $region13
  $region12: #{tpu_custom_call.1} parent=0 // pred_region
    %vm15 = vcmask 7168
    %16 = vst.msk [vmem:[#allocation2] sm:$0xff] %vm15, -inf
    %17 = vst.msk [vmem:[#allocation3] sm:$0xff] %vm15, 0.0
    %18 = vst.msk [vmem:[#allocation4] sm:$0xff] %vm15, 0.0
  $region13: #{tpu_custom_call.1} parent=0 // pred_fallthru
    _
  %v19 = vld [vmem:[%s0] sm:$0xff]
  %v20 = vld [vmem:[%s1] sm:$0xff]
  %v21 = vlaneseq
  %v22 = vand.u32 %v21, 127
  %s23 = smul.u32 0, 128
  %v24 = vstv %s23
  %v25 = vadd.s32 %v22, %v24
  %26 = vset.pattern.permute.xlu0 0
  %27 = vperm.xlu0 %26, %v20
  %v28 = vpop.permute.xlu0 %27
  %vm29 = vcmp.eq.s32.totalorder %v25, %v28
  %30 = vmax.xlane.f32.xlu0 %v19
  %v31 = vpop.xlane.xlu0 %30
  %v32 = vld [vmem:[#allocation2] sm:$0xff]
  %v33 = vmax.f32 %v32, %v31
  %v34 = vsub.f32 %v32, %v33
  %v35 = vmul.f32 %v34, 1.442695
  %v36 = vpow.pop %v35
  %38 = vset.pattern.permute.xlu0 0
  %39 = vperm.xlu0 %38, %v33
  %v40 = vpop.permute.xlu0 %39
  %v42 = vsub.f32 %v19, %v40
  %v43 = vmul.f32 %v42, 1.442695
  %v44 = vpow.pop %v43
  %v45 = vld [vmem:[#allocation3] sm:$0xff]
  %v46 = vmul.f32 %v36, %v45
  %47 = vadd.xlane.f32.xlu0 %v44
  %v48 = vpop.xlane.xlu0 %47
  %v49 = vadd.f32 %v46, %v48
  %vm50 = vcmask 7168
  %51 = vst.msk [vmem:[#allocation3] sm:$0xff] %vm50, %v49
  %v52 = vld [vmem:[#allocation4] sm:$0xff]
  %v53 = vsel %vm29, %v19, 0.0
  %54 = vadd.xlane.f32.xlu0 %v53
  %v55 = vpop.xlane.xlu0 %54
  %v56 = vadd.f32 %v52, %v55
  %57 = vst.msk [vmem:[#allocation4] sm:$0xff] %vm50, %v56
  %58 = vst.msk [vmem:[#allocation2] sm:$0xff] %vm50, %v33
  // Predicated region
  $region14: #{tpu_custom_call.1} parent=0 // pred_check
    %p59 = pneg %p11
  $region15: #{tpu_custom_call.1} parent=0 // pred_check_branch
    %61 = sbr.rel (%p59) target = $region17
  $region16: #{tpu_custom_call.1} parent=0 // pred_region
    %v62 = vld [vmem:[#allocation2] sm:$0xff]
    %v63 = vld [vmem:[#allocation3] sm:$0xff]
    %v64 = vlog2.pop %v63
    %v65 = vmul.f32 %v64, 0.6931472
    %v66 = vadd.f32 %v62, %v65
    %v67 = vld [vmem:[#allocation4] sm:$0xff]
    %v68 = vsub.f32 %v66, %v67
    %vm69 = vcmp.ge.s32.totalorder %v20, 0
    %v70 = vsel %vm69, %v68, 0.0
    %71 = vst.msk [vmem:[%s2] sm:$0xff] %vm50, %v70
  $region17: #{tpu_custom_call.1} parent=0 // pred_fallthru
    _
  // Predicated region
  $region18: #{tpu_custom_call.1} parent=0 // pred_check
    _
  $region19: #{tpu_custom_call.1} parent=0 // pred_check_branch
    %73 = sbr.rel (0) target = $region21
  $region20: #{tpu_custom_call.1} parent=0 // pred_region
    _
  $region21: #{tpu_custom_call.1} parent=0 // pred_fallthru
    _
  // Predicated region
  $region22: #{tpu_custom_call.1} parent=0 // pred_check
    _
  $region23: #{tpu_custom_call.1} parent=0 // pred_check_branch
    %75 = sbr.rel (0) target = $region25
  $region24: #{tpu_custom_call.1} parent=0 // pred_region
    _
  $region25: #{tpu_custom_call.1} parent=0 // pred_fallthru
    _

</llo_original>
